<compile_context>
chip_gen: v7x
topology: tpu7x:2x2x1
jax: 0.10.0
libtpu: 0.0.40
codegen_flags: <defaults>
</compile_context>

<pallas_src>
import jax
import jax.numpy as jnp
from jax import lax
from jax.experimental import pallas as pl
from jax.experimental.pallas import tpu as pltpu


CHUNK = 8                                # timesteps per scan chunk (f32 sublanes)
TARGET_BLOCK_BYTES = 4 * 1024 * 1024     # ~4 MiB per x / y block
MAX_CHANNEL_TILE = 512                   # lane width cap (keeps vreg pressure low)
VMEM_LIMIT_BYTES = 32 * 1024 * 1024      # fits 2x double-buffered 4 MiB blocks


def _cum_mul_sum_kernel(x_ref, d_ref, y_ref, carry_ref):
    """One (bt, st, ct) tile of y[t] = d * y[t-1] + x[t].

    x_ref / y_ref : (bt, st, ct)             d_ref : (1, ct) float32
    carry_ref     : (bt, CHUNK, ct) float32 scratch; carry_ref[b] holds the
                    running carry of batch row b replicated across CHUNK
                    sublanes.  Persists across sequence grid steps (the seq
                    axis is innermost and marked "arbitrary").
    """
    @pl.when(pl.program_id(2) == 0)
    def _():
        carry_ref[...] = jnp.zeros_like(carry_ref)

    bt, st, ct = x_ref.shape

    # ---- per-tile precompute (hoisted out of the chunk loop) ---------------
    d_b = jnp.broadcast_to(d_ref[...], (CHUNK, ct))           # (CHUNK, ct) f32
    t_idx = lax.broadcasted_iota(jnp.int32, (CHUNK, ct), 0)   # sublane index

    shifts, coeffs = [], []
    dpow = jnp.ones_like(d_b)            # will become d^(t+1)
    dk = d_b                             # d^(2^j)
    k = 1
    while k <= CHUNK:
        if k < CHUNK:
            shifts.append(k)
            coeffs.append(jnp.where(t_idx >= k, dk, 0.0))
        # bit-decompose (t+1): fold in d^k wherever bit k of (t+1) is set.
        dpow = dpow * jnp.where(((t_idx + 1) & k) != 0, dk, 1.0)
        dk = dk * dk
        k *= 2

    n_chunks = st // CHUNK

    def chunk_body(ci, carry_dummy):
        t0 = pl.multiple_of(ci * CHUNK, CHUNK)
        for b in range(bt):                                   # bt independent chains
            xc = x_ref[b, pl.ds(t0, CHUNK), :].astype(jnp.float32)   # (CHUNK, ct)
            s = xc
            for k, ck in zip(shifts, coeffs):
                # Hillis-Steele round: s[t] += d^k * s[t-k]  (t >= k; wrap masked)
                s = s + ck * pltpu.roll(s, k, axis=0)
            # s[t] = sum_{u<=t} d^(t-u) * x[u]; fold in the running carry.
            y = s + dpow * carry_ref[b]
            y_ref[b, pl.ds(t0, CHUNK), :] = y.astype(y_ref.dtype)
            # Next chunk's carry = last row of y, replicated over sublanes.
            carry_ref[b] = jnp.broadcast_to(y[CHUNK - 1:CHUNK, :], (CHUNK, ct))
        return carry_dummy

    lax.fori_loop(0, n_chunks, chunk_body, 0)


def _largest_divisor(n, cap):
    d = max(1, min(cap, n))
    while n % d != 0:
        d -= 1
    return d


def _largest_divisor_multiple(n, cap, quantum):
    """Largest multiple of `quantum` dividing n that is <= cap (n % quantum == 0)."""
    best = quantum
    cand = quantum
    limit = min(cap, n)
    while cand <= limit:
        if n % cand == 0:
            best = cand
        cand += quantum
    return best


def cum_mul_sum(x, d):
    """x: [bsz, seq_len, c], d: [c]  ->  y: [bsz, seq_len, c] (same dtype as x)."""
    bsz, seq_len, c = x.shape
    itemsize = jnp.dtype(x.dtype).itemsize
    # Sublane packing quantum of the in/out dtype (f32 -> 8 rows, bf16 -> 16, ...)
    seq_quantum = CHUNK * max(1, 4 // itemsize)

    # ---- channel tile: never pad channels -----------------------------------
    if c % 128 == 0:
        ct = _largest_divisor_multiple(c, MAX_CHANNEL_TILE, 128)
    else:
        ct = c                      # full-dim block; lane padding handled by Mosaic

    # ---- batch tile: a divisor of bsz (no batch padding) ---------------------
    bt = _largest_divisor(bsz, 8)

    # ---- megacore occupancy: keep >= 2 blocks on the parallel axes (v7x) -----
    if (bsz // bt) * (c // ct) < 2:
        if bsz >= 2:
            bt = _largest_divisor(bsz, bsz // 2)
        elif c % 128 == 0 and c >= 256:
            ct = _largest_divisor_multiple(c, c // 2, 128)

    # ---- sequence tile: ~TARGET_BLOCK_BYTES per block; prefer a divisor of the
    #      (8/16-aligned) sequence so x is not padded and y is not sliced -------
    row_bytes = bt * ct * itemsize
    st_target = max(seq_quantum,
                    (TARGET_BLOCK_BYTES // row_bytes) // seq_quantum * seq_quantum)
    seq_al = pl.cdiv(seq_len, seq_quantum) * seq_quantum
    st_target = min(st_target, seq_al)
    st = _largest_divisor_multiple(seq_al, st_target, seq_quantum)
    if st * 4 < st_target:
        st = st_target              # pathological length: pad instead of tiny tiles
    seq_pad = pl.cdiv(seq_len, st) * st

    x_in = x
    if seq_pad != seq_len:
        x_in = jnp.pad(x, ((0, 0), (0, seq_pad - seq_len), (0, 0)))
    d_row = d.astype(jnp.float32).reshape(1, c)

    grid = (bsz // bt, c // ct, seq_pad // st)

    n_elems = bsz * seq_len * c
    cost = pl.CostEstimate(
        flops=2 * n_elems,
        transcendentals=0,
        bytes_accessed=2 * n_elems * itemsize + c * 4,
    )

    y = pl.pallas_call(
        _cum_mul_sum_kernel,
        out_shape=jax.ShapeDtypeStruct((bsz, seq_pad, c), x.dtype),
        grid_spec=pltpu.PrefetchScalarGridSpec(
            num_scalar_prefetch=0,
            grid=grid,
            in_specs=[
                pl.BlockSpec((bt, st, ct), lambda b, ci, s: (b, s, ci)),
                pl.BlockSpec((1, ct), lambda b, ci, s: (0, ci)),
            ],
            out_specs=pl.BlockSpec((bt, st, ct), lambda b, ci, s: (b, s, ci)),
            scratch_shapes=[pltpu.VMEM((bt, CHUNK, ct), jnp.float32)],
        ),
        compiler_params=pltpu.CompilerParams(
            # batch / channel tiles are independent; seq carries the recurrence.
            dimension_semantics=("parallel", "parallel", "arbitrary"),
            vmem_limit_bytes=VMEM_LIMIT_BYTES,
        ),
        cost_estimate=cost,
    )(x_in, d_row)

    if seq_pad != seq_len:
        y = y[:, :seq_len, :]
    return y


def cum_mul_sum_ref(x, d):
    """Pure-JAX reference (float32 accumulation): y[t] = d * y[t-1] + x[t]."""
    x32 = x.astype(jnp.float32)
    d32 = d.astype(jnp.float32)

    def step(carry, xt):
        new = d32[None, :] * carry + xt
        return new, new

    x_t = jnp.swapaxes(x32, 0, 1)                  # (seq, bsz, c)
    carry0 = jnp.zeros((x.shape[0], x.shape[2]), jnp.float32)
    _, ys = lax.scan(step, carry0, x_t)
    return jnp.swapaxes(ys, 0, 1)                  # (bsz, seq, c)


if __name__ == "__main__":
    root = jax.random.PRNGKey(0)

    def _run_case(salt, bsz, seq_len, c, dtype, atol, rtol):
        kx, kd = jax.random.split(jax.random.fold_in(root, salt))
        x = jax.random.normal(kx, (bsz, seq_len, c), dtype=jnp.float32)
        d = jax.random.uniform(kd, (c,), dtype=jnp.float32, minval=0.1, maxval=0.95)
        x = x.astype(dtype)
        y = cum_mul_sum(x, d)
        jax.block_until_ready(y)
        assert y.shape == x.shape and y.dtype == x.dtype
        y_ref = cum_mul_sum_ref(x, d)
        assert jnp.allclose(y.astype(jnp.float32), y_ref, atol=atol, rtol=rtol), (
            f"mismatch vs reference for case {(bsz, seq_len, c, dtype)}")

    # small, lane-aligned float32 case
    _run_case(0, 2, 64, 256, jnp.float32, 1e-4, 1e-4)
    # ragged seq / non-multiple-of-128 channels / odd batch (padding + tiling paths)
    _run_case(1, 3, 21, 40, jnp.float32, 1e-4, 1e-4)
    # bf16 inputs (float32 accumulation in-kernel, bf16 output rounding)
    _run_case(2, 2, 32, 128, jnp.bfloat16, 5e-2, 5e-2)

    print("KERNEL_OK")
</pallas_src>

<mosaic_0001>
module attributes {stable_mosaic.version = 11 : i64} {
  func.func @_cum_mul_sum_kernel(%arg0: i32, %arg1: i32, %arg2: i32, %arg3: memref<1x64x256xf32, #tpu.memory_space<vmem>>, %arg4: memref<1x256xf32, #tpu.memory_space<vmem>>, %arg5: memref<1x64x256xf32, #tpu.memory_space<vmem>>, %arg6: memref<1x8x256xf32, #tpu.memory_space<vmem>>) attributes {dimension_semantics = [#tpu.dimension_semantics<parallel>, #tpu.dimension_semantics<parallel>, #tpu.dimension_semantics<arbitrary>], iteration_bounds = array<i64: 2, 1, 1>, scalar_prefetch = 0 : i64, scratch_operands = 1 : i64, tpu.core_type = #tpu.core_type<tc>, window_params = [{transform_indices = @transform_0, window_bounds = array<i64: 1, 64, 256>}, {transform_indices = @transform_1, window_bounds = array<i64: 1, 256>}, {transform_indices = @transform_2, window_bounds = array<i64: 1, 64, 256>}]} {
    %c0_i32 = arith.constant 0 : i32
    %0 = arith.cmpi eq, %arg2, %c0_i32 : i32
    %1 = arith.extui %0 : i1 to i32
    %c0_i32_0 = arith.constant 0 : i32
    %2 = arith.cmpi ne, %1, %c0_i32_0 : i32
    scf.if %2 {
      %cst_24 = arith.constant 0.000000e+00 : f32
      %60 = vector.broadcast %cst_24 : f32 to vector<1x8x256xf32>
      %c0_25 = arith.constant 0 : index
      %c0_26 = arith.constant 0 : index
      %c0_27 = arith.constant 0 : index
      %61 = vector.load %arg6[%c0_25, %c0_26, %c0_27] : memref<1x8x256xf32, #tpu.memory_space<vmem>>, vector<1x8x256xf32>
      tpu.vector_store %arg6[%c0_25, %c0_26, %c0_27], %60 {strides = array<i32>} : memref<1x8x256xf32, #tpu.memory_space<vmem>>, vector<1x8x256xf32>,
    } else {
    }
    %c0 = arith.constant 0 : index
    %c0_1 = arith.constant 0 : index
    %3 = vector.load %arg4[%c0, %c0_1] : memref<1x256xf32, #tpu.memory_space<vmem>>, vector<1x256xf32>
    %4 = vector.shape_cast %3 : vector<1x256xf32> to vector<1x256xf32>
    %5 = vector.broadcast %4 : vector<1x256xf32> to vector<8x256xf32>
    %6 = tpu.iota {dimensions = array<i32: 0>} : vector<8x256xi32>
    %cst = arith.constant 1.000000e+00 : f32
    %7 = vector.broadcast %cst : f32 to vector<8x256xf32>
    %c1_i32 = arith.constant 1 : i32
    %8 = vector.broadcast %c1_i32 : i32 to vector<8x256xi32>
    %9 = arith.cmpi sge, %6, %8 : vector<8x256xi32>
    %cst_2 = arith.constant 0.000000e+00 : f32
    %10 = vector.broadcast %cst_2 : f32 to vector<8x256xf32>
    %11 = arith.select %9, %5, %10 : vector<8x256xi1>, vector<8x256xf32>
    %c1_i32_3 = arith.constant 1 : i32
    %12 = vector.broadcast %c1_i32_3 : i32 to vector<8x256xi32>
    %13 = arith.addi %6, %12 : vector<8x256xi32>
    %c1_i32_4 = arith.constant 1 : i32
    %14 = vector.broadcast %c1_i32_4 : i32 to vector<8x256xi32>
    %15 = arith.andi %13, %14 : vector<8x256xi32>
    %c0_i32_5 = arith.constant 0 : i32
    %16 = vector.broadcast %c0_i32_5 : i32 to vector<8x256xi32>
    %17 = arith.cmpi ne, %15, %16 : vector<8x256xi32>
    %cst_6 = arith.constant 1.000000e+00 : f32
    %18 = vector.broadcast %cst_6 : f32 to vector<8x256xf32>
    %19 = arith.select %17, %5, %18 : vector<8x256xi1>, vector<8x256xf32>
    %20 = arith.mulf %7, %19 : vector<8x256xf32>
    %21 = arith.mulf %5, %5 : vector<8x256xf32>
    %c2_i32 = arith.constant 2 : i32
    %22 = vector.broadcast %c2_i32 : i32 to vector<8x256xi32>
    %23 = arith.cmpi sge, %6, %22 : vector<8x256xi32>
    %cst_7 = arith.constant 0.000000e+00 : f32
    %24 = vector.broadcast %cst_7 : f32 to vector<8x256xf32>
    %25 = arith.select %23, %21, %24 : vector<8x256xi1>, vector<8x256xf32>
    %c1_i32_8 = arith.constant 1 : i32
    %26 = vector.broadcast %c1_i32_8 : i32 to vector<8x256xi32>
    %27 = arith.addi %6, %26 : vector<8x256xi32>
    %c2_i32_9 = arith.constant 2 : i32
    %28 = vector.broadcast %c2_i32_9 : i32 to vector<8x256xi32>
    %29 = arith.andi %27, %28 : vector<8x256xi32>
    %c0_i32_10 = arith.constant 0 : i32
    %30 = vector.broadcast %c0_i32_10 : i32 to vector<8x256xi32>
    %31 = arith.cmpi ne, %29, %30 : vector<8x256xi32>
    %cst_11 = arith.constant 1.000000e+00 : f32
    %32 = vector.broadcast %cst_11 : f32 to vector<8x256xf32>
    %33 = arith.select %31, %21, %32 : vector<8x256xi1>, vector<8x256xf32>
    %34 = arith.mulf %20, %33 : vector<8x256xf32>
    %35 = arith.mulf %21, %21 : vector<8x256xf32>
    %c4_i32 = arith.constant 4 : i32
    %36 = vector.broadcast %c4_i32 : i32 to vector<8x256xi32>
    %37 = arith.cmpi sge, %6, %36 : vector<8x256xi32>
    %cst_12 = arith.constant 0.000000e+00 : f32
    %38 = vector.broadcast %cst_12 : f32 to vector<8x256xf32>
    %39 = arith.select %37, %35, %38 : vector<8x256xi1>, vector<8x256xf32>
    %c1_i32_13 = arith.constant 1 : i32
    %40 = vector.broadcast %c1_i32_13 : i32 to vector<8x256xi32>
    %41 = arith.addi %6, %40 : vector<8x256xi32>
    %c4_i32_14 = arith.constant 4 : i32
    %42 = vector.broadcast %c4_i32_14 : i32 to vector<8x256xi32>
    %43 = arith.andi %41, %42 : vector<8x256xi32>
    %c0_i32_15 = arith.constant 0 : i32
    %44 = vector.broadcast %c0_i32_15 : i32 to vector<8x256xi32>
    %45 = arith.cmpi ne, %43, %44 : vector<8x256xi32>
    %cst_16 = arith.constant 1.000000e+00 : f32
    %46 = vector.broadcast %cst_16 : f32 to vector<8x256xf32>
    %47 = arith.select %45, %35, %46 : vector<8x256xi1>, vector<8x256xf32>
    %48 = arith.mulf %34, %47 : vector<8x256xf32>
    %49 = arith.mulf %35, %35 : vector<8x256xf32>
    %c1_i32_17 = arith.constant 1 : i32
    %50 = vector.broadcast %c1_i32_17 : i32 to vector<8x256xi32>
    %51 = arith.addi %6, %50 : vector<8x256xi32>
    %c8_i32 = arith.constant 8 : i32
    %52 = vector.broadcast %c8_i32 : i32 to vector<8x256xi32>
    %53 = arith.andi %51, %52 : vector<8x256xi32>
    %c0_i32_18 = arith.constant 0 : i32
    %54 = vector.broadcast %c0_i32_18 : i32 to vector<8x256xi32>
    %55 = arith.cmpi ne, %53, %54 : vector<8x256xi32>
    %cst_19 = arith.constant 1.000000e+00 : f32
    %56 = vector.broadcast %cst_19 : f32 to vector<8x256xf32>
    %57 = arith.select %55, %49, %56 : vector<8x256xi1>, vector<8x256xf32>
    %58 = arith.mulf %48, %57 : vector<8x256xf32>
    %c0_i32_20 = arith.constant 0 : i32
    %c8_i32_21 = arith.constant 8 : i32
    %59 = arith.addi %c0_i32_20, %c8_i32_21 : i32
    %c1_i32_22 = arith.constant 1 : i32
    scf.for %arg7 = %c0_i32_20 to %59 step %c1_i32_22  : i32 {
      %c8_i32_24 = arith.constant 8 : i32
      %60 = arith.muli %arg7, %c8_i32_24 : i32
      %61 = tpu.assume_multiple %60, 8 : i32
      %c0_25 = arith.constant 0 : index
      %62 = arith.index_cast %61 : i32 to index
      %c0_26 = arith.constant 0 : index
      %63 = vector.load %arg3[%c0_25, %62, %c0_26] : memref<1x64x256xf32, #tpu.memory_space<vmem>>, vector<1x8x256xf32>
      %64 = vector.shape_cast %63 : vector<1x8x256xf32> to vector<8x256xf32>
      %c1_i32_27 = arith.constant 1 : i32
      %65 = tpu.dynamic_rotate %64 by %c1_i32_27 dim 0 : vector<8x256xf32>, i32 -> vector<8x256xf32>
      %66 = arith.mulf %11, %65 : vector<8x256xf32>
      %67 = arith.addf %64, %66 : vector<8x256xf32>
      %c2_i32_28 = arith.constant 2 : i32
      %68 = tpu.dynamic_rotate %67 by %c2_i32_28 dim 0 : vector<8x256xf32>, i32 -> vector<8x256xf32>
      %69 = arith.mulf %25, %68 : vector<8x256xf32>
      %70 = arith.addf %67, %69 : vector<8x256xf32>
      %c4_i32_29 = arith.constant 4 : i32
      %71 = tpu.dynamic_rotate %70 by %c4_i32_29 dim 0 : vector<8x256xf32>, i32 -> vector<8x256xf32>
      %72 = arith.mulf %39, %71 : vector<8x256xf32>
      %73 = arith.addf %70, %72 : vector<8x256xf32>
      %c0_30 = arith.constant 0 : index
      %c0_31 = arith.constant 0 : index
      %c0_32 = arith.constant 0 : index
      %74 = vector.load %arg6[%c0_30, %c0_31, %c0_32] : memref<1x8x256xf32, #tpu.memory_space<vmem>>, vector<1x8x256xf32>
      %75 = vector.shape_cast %74 : vector<1x8x256xf32> to vector<8x256xf32>
      %76 = arith.mulf %58, %75 : vector<8x256xf32>
      %77 = arith.addf %73, %76 : vector<8x256xf32>
      %c0_33 = arith.constant 0 : index
      %78 = arith.index_cast %61 : i32 to index
      %c0_34 = arith.constant 0 : index
      %79 = vector.load %arg5[%c0_33, %78, %c0_34] : memref<1x64x256xf32, #tpu.memory_space<vmem>>, vector<1x8x256xf32>
      %80 = vector.shape_cast %79 : vector<1x8x256xf32> to vector<8x256xf32>
      %81 = vector.shape_cast %77 : vector<8x256xf32> to vector<1x8x256xf32>
      tpu.vector_store %arg5[%c0_33, %78, %c0_34], %81 {strides = array<i32>} : memref<1x64x256xf32, #tpu.memory_space<vmem>>, vector<1x8x256xf32>,
      %82 = vector.extract_strided_slice %77 {offsets = [7, 0], sizes = [1, 256], strides = [1, 1]} : vector<8x256xf32> to vector<1x256xf32>
      %83 = vector.shape_cast %82 : vector<1x256xf32> to vector<1x256xf32>
      %84 = vector.broadcast %83 : vector<1x256xf32> to vector<8x256xf32>
      %c0_35 = arith.constant 0 : index
      %c0_36 = arith.constant 0 : index
      %c0_37 = arith.constant 0 : index
      %85 = vector.load %arg6[%c0_35, %c0_36, %c0_37] : memref<1x8x256xf32, #tpu.memory_space<vmem>>, vector<1x8x256xf32>
      %86 = vector.shape_cast %85 : vector<1x8x256xf32> to vector<8x256xf32>
      %87 = vector.shape_cast %84 : vector<8x256xf32> to vector<1x8x256xf32>
      tpu.vector_store %arg6[%c0_35, %c0_36, %c0_37], %87 {strides = array<i32>} : memref<1x8x256xf32, #tpu.memory_space<vmem>>, vector<1x8x256xf32>,
    }
    %c8_i32_23 = arith.constant 8 : i32
    return
  }
  func.func @transform_0(%arg0: i32, %arg1: i32, %arg2: i32) -> (i32, i32, i32) {
    %c0_i32 = arith.constant 0 : i32
    return %arg0, %arg2, %arg1 : i32, i32, i32
  }
  func.func @transform_1(%arg0: i32, %arg1: i32, %arg2: i32) -> (i32, i32) {
    %c0_i32 = arith.constant 0 : i32
    %c0_i32_0 = arith.constant 0 : i32
    return %c0_i32, %arg1 : i32, i32
  }
  func.func @transform_2(%arg0: i32, %arg1: i32, %arg2: i32) -> (i32, i32, i32) {
    %c0_i32 = arith.constant 0 : i32
    return %arg0, %arg2, %arg1 : i32, i32, i32
  }
}

</mosaic_0001>

<llo_original>
// kernel: tpu_custom_call.1
$region0: #{tpu_custom_call.1}
  #allocation0 [shape = 'u32[]', space=smem, size = 0x4, offset = 0x4, fixed_abs, tag = 'smem constant byte address 0x4 - core index']
  #allocation1 [shape = 'u32[144,128]{1,0:T(1,128)}', space=vmem, size = 0x12000, scoped, tag = 'internal scratch']
  #allocation2 [shape = 'f32[1,8,256]{2,1,0:T(8,128)}', space=vmem, size = 0x2000, scoped, tag = 'scratch operand']
  %s0 = inlined_call_operand.hbm [shape: f32[2,64,256], index: 0, kind: input, shape index: {}]
  %s1 = inlined_call_operand.vmem [shape: f32[1,256], index: 1, kind: input, shape index: {}]
  %s2 = inlined_call_operand.hbm [shape: f32[2,64,256], index: 2, kind: output, shape index: {}]
  %s3 = sld [smem:[#allocation0]]
  $region56: #{tpu_custom_call.1} parent=0
    _
  %s5 = ssub.s32 1, %s3
  %s6 = scalar_select 0, %s5, %s3
  $region1: #{tpu_custom_call.1} parent=0
    #allocation3 [shape = 'u8[131072]{0}', space=vmem, size = 0x20000, scoped, tag = 'input window, operand 0']
    #allocation4 [shape = 's32[2]{0}', space=sflag, size = 0x8, scoped, tag = 'scoped memory for tpu_custom_call.1']
    #allocation5 [shape = 's32[2]{0}', space=sflag, size = 0x8, scoped, tag = 'scoped memory for tpu_custom_call.1']
    #allocation6 [shape = 'u8[131072]{0}', space=vmem, size = 0x20000, scoped, tag = 'output window, operand 0']
    %7 = vsyncpa [#allocation4], 0
    %s8 = scalar_lea.sflag [#allocation4], 1
    %9 = vsyncpa %s8, 0
    %10 = vsyncpa [#allocation5], 0
    %s11 = scalar_lea.sflag [#allocation5], 1
    %12 = vsyncpa %s11, 0
    loop: start=0, step=1, limit=4
    $region2: #{tpu_custom_call.1} parent=1 // loop_pre_header
      _
    $region3: #{tpu_custom_call.1} parent=1 // loop_header
      %s14 = sphi 0, %s18
      %p15 = scmp.ge.s32.totalorder %s14, 4
      %s21 = sphi 0, %s40
      %s22 = sphi 0, %s36
      %s23 = sphi 0, %s32
      %s24 = sphi 0, %s21
      %s25 = sphi 0, %s22
      %s26 = sphi 0, %s23
      %s27 = sphi 0, %s24
      %s28 = sphi 0, %s25
      %s29 = sphi 0, %s26
      %s47 = sphi 0, %s49
      %s50 = sphi 0, %s47
      %s51 = sphi 0, %s50
      %s67 = sphi 0, %s51
      %s73 = sphi 0, %s75
      %s76 = sphi 0, %s73
      %s77 = sphi 0, %s76
      %s93 = sphi 0, %s77
      %s103 = sphi 0, %s105
      %s106 = sphi 0, %s103
      %s107 = sphi 0, %s106
      %s123 = sphi 0, %s107
    $region4: #{tpu_custom_call.1} parent=1 // loop_header_branch
      %17 = sbr.rel (%p15) target = $region8
    $region5: #{tpu_custom_call.1} parent=1 // loop_body
      %s19 = ssub.s32 %s14, 1
      %s20 = ssub.s32 %s14, 2
      %s30 = sadd.s32 1, %s23
      %p31 = scmp.ge.s32.totalorder %s30, 1
      %s32 = scalar_select %p31, 0, %s30
      %s33 = sadd.s32 1, %s22
      %s34 = scalar_select %p31, %s33, %s22
      %p35 = scmp.ge.s32.totalorder %s34, 1
      %s36 = scalar_select %p35, 0, %s34
      %s37 = sadd.s32 1, %s21
      %s38 = scalar_select %p35, %s37, %s21
      %p39 = scmp.ge.s32.totalorder %s38, 2
      %s40 = scalar_select %p39, 0, %s38
      %s41 = ssub.s32 %s21, %s40
      %s42 = ssub.s32 %s23, %s32
      %s43 = sor.u32 %s41, %s42
      %s44 = ssub.s32 %s22, %s36
      %s45 = sor.u32 %s43, %s44
      %p46 = scmp.eq.s32.totalorder %s45, 0
      %s48 = sadd.s32 %s47, 1
      %s49 = scalar_select %p46, %s47, %s48
      %p52 = pneg %p46
      %p53 = scmp.eq.s32.totalorder %s14, 1
      %p54 = por %p52, %p53
      %p55 = scmp.ne.s32.totalorder %s47, %s50
      %p56 = scmp.eq.s32.totalorder %s14, 0
      %p57 = por %p55, %p56
      %p58 = scmp.ne.s32.totalorder %s47, %s50
      %p59 = scmp.eq.s32.totalorder %s19, 1
      %p60 = por %p58, %p59
      %p61 = scmp.ne.s32.totalorder %s50, %s51
      %p62 = scmp.eq.s32.totalorder %s19, 0
      %p63 = por %p61, %p62
      %p64 = scmp.ne.s32.totalorder %s50, %s51
      %p65 = scmp.eq.s32.totalorder %s20, 1
      %p66 = por %p64, %p65
      %p68 = scmp.ne.s32.totalorder %s51, %s67
      %p69 = scmp.eq.s32.totalorder %s20, 0
      %p70 = por %p68, %p69
      %s71 = ssub.s32 %s22, %s36
      %p72 = scmp.eq.s32.totalorder %s71, 0
      %s74 = sadd.s32 %s73, 1
      %s75 = scalar_select %p72, %s73, %s74
      %p78 = pneg %p72
      %p79 = scmp.eq.s32.totalorder %s14, 1
      %p80 = por %p78, %p79
      %p81 = scmp.ne.s32.totalorder %s73, %s76
      %p82 = scmp.eq.s32.totalorder %s14, 0
      %p83 = por %p81, %p82
      %p84 = scmp.ne.s32.totalorder %s73, %s76
      %p85 = scmp.eq.s32.totalorder %s19, 1
      %p86 = por %p84, %p85
      %p87 = scmp.ne.s32.totalorder %s76, %s77
      %p88 = scmp.eq.s32.totalorder %s19, 0
      %p89 = por %p87, %p88
      %p90 = scmp.ne.s32.totalorder %s76, %s77
      %p91 = scmp.eq.s32.totalorder %s20, 1
      %p92 = por %p90, %p91
      %p94 = scmp.ne.s32.totalorder %s77, %s93
      %p95 = scmp.eq.s32.totalorder %s20, 0
      %p96 = por %p94, %p95
      %s97 = ssub.s32 %s21, %s40
      %s98 = ssub.s32 %s23, %s32
      %s99 = sor.u32 %s97, %s98
      %s100 = ssub.s32 %s22, %s36
      %s101 = sor.u32 %s99, %s100
      %p102 = scmp.eq.s32.totalorder %s101, 0
      %s104 = sadd.s32 %s103, 1
      %s105 = scalar_select %p102, %s103, %s104
      %p108 = pneg %p102
      %p109 = scmp.eq.s32.totalorder %s14, 1
      %p110 = por %p108, %p109
      %p111 = scmp.ne.s32.totalorder %s103, %s106
      %p112 = scmp.eq.s32.totalorder %s14, 0
      %p113 = por %p111, %p112
      %p114 = scmp.ne.s32.totalorder %s103, %s106
      %p115 = scmp.eq.s32.totalorder %s19, 1
      %p116 = por %p114, %p115
      %p117 = scmp.ne.s32.totalorder %s106, %s107
      %p118 = scmp.eq.s32.totalorder %s19, 0
      %p119 = por %p117, %p118
      %p120 = scmp.ne.s32.totalorder %s106, %s107
      %p121 = scmp.eq.s32.totalorder %s20, 1
      %p122 = por %p120, %p121
      %p124 = scmp.ne.s32.totalorder %s107, %s123
      %p125 = scmp.eq.s32.totalorder %s20, 0
      %p126 = por %p124, %p125
      %p127 = scmp.le.s32.totalorder 1, %s14
      %p128 = scmp.lt.s32.totalorder %s14, 3
      %p129 = pnand %p127, %p128
      %p130 = pneg %p129
      // Predicated region
      $region9: #{tpu_custom_call.1} parent=5 // pred_check
        _
      $region10: #{tpu_custom_call.1} parent=5 // pred_check_branch
        %132 = sbr.rel (%p129) target = $region12
      $region11: #{tpu_custom_call.1} parent=5 // pred_region
        %s133 = ssub.s32 %s14, 1
        // Predicated region
        $region13: #{tpu_custom_call.1} parent=11 // pred_check
          %p134 = pneg %p89
        $region14: #{tpu_custom_call.1} parent=11 // pred_check_branch
          %136 = sbr.rel (%p134) target = $region16
        $region15: #{tpu_custom_call.1} parent=11 // pred_region
          %s137 = smul.u32 2, %s25
          %p138 = scmp.lt.s32.totalorder %s137, 1
          %s139 = scalar_select %p138, %s137, 1
          %s140 = scalar_lea.vmem %s1, %s139
          %s141 = smul.u32 2, %s25
        $region16: #{tpu_custom_call.1} parent=11 // pred_fallthru
          _
      $region12: #{tpu_custom_call.1} parent=5 // pred_fallthru
        _
      %p142 = scmp.lt.s32.totalorder %s14, 2
      // Predicated region
      $region17: #{tpu_custom_call.1} parent=5 // pred_check
        %p143 = pneg %p142
      $region18: #{tpu_custom_call.1} parent=5 // pred_check_branch
        %145 = sbr.rel (%p143) target = $region20
      $region19: #{tpu_custom_call.1} parent=5 // pred_region
        // Predicated region
        $region21: #{tpu_custom_call.1} parent=19 // pred_check
          %p146 = pneg %p57
        $region22: #{tpu_custom_call.1} parent=19 // pred_check_branch
          %148 = sbr.rel (%p146) target = $region24
        $region23: #{tpu_custom_call.1} parent=19 // pred_region
          %s149 = sand.u32 %s47, 1
          %s150 = scalar_lea.sflag [#allocation4], %s149
          %s151 = sand.u32 %s47, 1
          %s152 = smul.addr %s151, 128
          %s153 = scalar_lea.vmem [#allocation3], %s152
          %s154 = smul.u32 8, %s23
          %s155 = smul.u32 2, %s22
          %s157 = ssub.s32 2048, 2048
          %158 = vsyncadd %s150, %s157
          %s159 = smul.addr %s154, 2
          %s160 = sadd.s32 %s155, %s159
          %s161 = smul.addr %s21, 16
          %s162 = sadd.s32 %s160, %s161
          %s163 = smul.addr %s162, 128
          %s164 = scalar_lea.hbm %s0, %s163
          %s165 = sshll.u32 %s153, 4
          %s166 = int_to_ptr.vmem [resolvable:$true] %s165
          %171 = dma.hbm_to_vmem [thread:$0]  %s164, 2048, %s166, %s150, 256, 256, 16
        $region24: #{tpu_custom_call.1} parent=19 // pred_fallthru
          _
      $region20: #{tpu_custom_call.1} parent=5 // pred_fallthru
        _
      %p172 = scmp.le.s32.totalorder 1, %s14
      %p173 = scmp.lt.s32.totalorder %s14, 3
      %p174 = pnand %p172, %p173
      %p175 = pneg %p174
      // Predicated region
      $region25: #{tpu_custom_call.1} parent=5 // pred_check
        _
      $region26: #{tpu_custom_call.1} parent=5 // pred_check_branch
        %177 = sbr.rel (%p174) target = $region28
      $region27: #{tpu_custom_call.1} parent=5 // pred_region
        %s178 = ssub.s32 %s14, 1
        %s179 = sand.u32 %s50, 1
        %s180 = scalar_lea.sflag [#allocation4], %s179
        %s181 = sand.u32 %s50, 1
        %s182 = smul.addr %s181, 128
        %s183 = scalar_lea.vmem [#allocation3], %s182
        // Predicated region
        $region29: #{tpu_custom_call.1} parent=27 // pred_check
          %p184 = pneg %p63
        $region30: #{tpu_custom_call.1} parent=27 // pred_check_branch
          %186 = sbr.rel (%p184) target = $region32
        $region31: #{tpu_custom_call.1} parent=27 // pred_region
          %187 = dma.done %s180, 2048
        $region32: #{tpu_custom_call.1} parent=27 // pred_fallthru
          _
        %s188 = sand.u32 %s50, 1
        %s189 = scalar_lea.sflag [#allocation4], %s188
        %s190 = sand.u32 %s50, 1
        %s191 = smul.addr %s190, 128
        %s192 = scalar_lea.vmem [#allocation3], %s191
        %p193 = pneg %p63
        %p194 = pneg %p60
        %s195 = smul.u32 2, %s25
        %p196 = scmp.lt.s32.totalorder %s195, 1
        %s197 = scalar_select %p196, %s195, 1
        %s198 = scalar_lea.vmem %s1, %s197
        %p199 = pneg %p89
        %p200 = pneg %p86
        %p201 = pneg %p119
        %p202 = pneg %p116
        %s203 = sand.u32 %s106, 1
        %s204 = scalar_lea.sflag [#allocation5], %s203
        %s205 = sand.u32 %s106, 1
        %s206 = smul.addr %s205, 128
        %s207 = scalar_lea.vmem [#allocation6], %s206
        %s208 = smul.u32 8, %s26
        %s209 = smul.u32 2, %s25
        %s210 = smul.u32 2, %s25
        %p211 = scmp.lt.s32.totalorder %s210, 1
        %s212 = scalar_select %p211, %s210, 1
        %s213 = scalar_lea.vmem %s1, %s212
        %s214 = smul.u32 2, %s25
        %s215 = smul.u32 8, %s26
        %s216 = smul.u32 2, %s25
        %p217 = scmp.eq.s32.totalorder %s26, 0
        // Predicated region
        $region33: #{tpu_custom_call.1} parent=27 // pred_check
          %p218 = pneg %p217
        $region34: #{tpu_custom_call.1} parent=27 // pred_check_branch
          %220 = sbr.rel (%p218) target = $region36
        $region35: #{tpu_custom_call.1} parent=27 // pred_region
          %221 = vst [vmem:[#allocation2] sm:$0xff] 0.0
          %222 = vst [vmem:[#allocation2 + $0x8] sm:$0xff] 0.0
        $region36: #{tpu_custom_call.1} parent=27 // pred_fallthru
          _
        %v223 = vld [vmem:[%s213] sm:$0x3]
        %v225 = vlaneseq
        %v226 = vshrl.u32 %v225, 7
        %v227 = vsub.s32 0, %v226
        %v228 = vrot.slane %v223, %v227
        %v229 = vlaneseq
        %v230 = vshrl.u32 %v229, 7
        %v231 = vsub.s32 1, %v230
        %v232 = vrot.slane %v223, %v231
        %v235 = vlaneseq
        %v236 = vshrl.u32 %v235, 7
        %vm237 = vcmp.ge.s32.totalorder %v236, 1
        %v238 = vsel %vm237, %v228, 0.0
        %v239 = vsel %vm237, %v232, 0.0
        %v240 = vadd.s32 %v236, 1
        %v241 = vand.u32 %v240, 1
        %vm242 = vcmp.ne.s32.totalorder %v241, 0
        %v243 = vsel %vm242, %v228, 1.0
        %v244 = vsel %vm242, %v232, 1.0
        %v245 = vmul.f32 %v228, %v228
        %v246 = vmul.f32 %v232, %v232
        %vm247 = vcmp.ge.s32.totalorder %v236, 2
        %v248 = vsel %vm247, %v245, 0.0
        %v249 = vsel %vm247, %v246, 0.0
        %v250 = vand.u32 %v240, 2
        %vm251 = vcmp.ne.s32.totalorder %v250, 0
        %v252 = vsel %vm251, %v245, 1.0
        %v253 = vsel %vm251, %v246, 1.0
        %v254 = vmul.f32 %v243, %v252
        %v255 = vmul.f32 %v244, %v253
        %v256 = vmul.f32 %v245, %v245
        %v257 = vmul.f32 %v246, %v246
        %vm258 = vcmp.ge.s32.totalorder %v236, 4
        %v259 = vsel %vm258, %v256, 0.0
        %v260 = vsel %vm258, %v257, 0.0
        %v261 = vand.u32 %v240, 4
        %vm262 = vcmp.ne.s32.totalorder %v261, 0
        %v263 = vsel %vm262, %v256, 1.0
        %v264 = vsel %vm262, %v257, 1.0
        %v265 = vmul.f32 %v254, %v263
        %v266 = vmul.f32 %v255, %v264
        %v267 = vmul.f32 %v256, %v256
        %v268 = vmul.f32 %v257, %v257
        %v269 = vand.u32 %v240, 8
        %vm270 = vcmp.ne.s32.totalorder %v269, 0
        %v271 = vsel %vm270, %v267, 1.0
        %v272 = vsel %vm270, %v268, 1.0
        %v273 = vmul.f32 %v265, %v271
        %v274 = vmul.f32 %v266, %v272
        loop: start=0, step=1, limit=8
        $region37: #{tpu_custom_call.1} parent=27 // loop_pre_header
          _
        $region38: #{tpu_custom_call.1} parent=27 // loop_header
          %s276 = sphi 0, %s280
          %p277 = scmp.ge.s32.totalorder %s276, 8
        $region39: #{tpu_custom_call.1} parent=27 // loop_header_branch
          %279 = sbr.rel (%p277) target = $region43
        $region40: #{tpu_custom_call.1} parent=27 // loop_body
          %s281 = smul.u32 %s276, 8
          %s282 = sshra.s32 %s281, 3
          %s283 = sand.u32 %s281, 7
          %s284 = smul.u32 %s282, 2
          %s285 = smul.addr %s284, 8
          %s286 = scalar_lea.vmem %s183, %s285 [#allocation3]
          %v287 = vld [vmem:[%s286] sm:$0xff]
          %v288 = vld [vmem:[%s286 + $0x8] sm:$0xff]
          %v289 = vrot.slane %v287, 7
          %v290 = vrot.slane %v288, 7
          %v291 = vmul.f32 %v238, %v289
          %v292 = vmul.f32 %v239, %v290
          %v293 = vadd.f32 %v287, %v291
          %v294 = vadd.f32 %v288, %v292
          %v295 = vrot.slane %v293, 6
          %v296 = vrot.slane %v294, 6
          %v297 = vmul.f32 %v248, %v295
          %v298 = vmul.f32 %v249, %v296
          %v299 = vadd.f32 %v293, %v297
          %v300 = vadd.f32 %v294, %v298
          %v301 = vrot.slane %v299, 4
          %v302 = vrot.slane %v300, 4
          %v303 = vmul.f32 %v259, %v301
          %v304 = vmul.f32 %v260, %v302
          %v305 = vadd.f32 %v299, %v303
          %v306 = vadd.f32 %v300, %v304
          %v307 = vld [vmem:[#allocation2] sm:$0xff]
          %v308 = vld [vmem:[#allocation2 + $0x8] sm:$0xff]
          %v309 = vmul.f32 %v273, %v307
          %v310 = vmul.f32 %v274, %v308
          %v311 = vadd.f32 %v305, %v309
          %v312 = vadd.f32 %v306, %v310
          %s313 = smul.addr %s284, 8
          %s314 = scalar_lea.vmem %s207, %s313 [#allocation6]
          %315 = vst [vmem:[%s314] sm:$0xff] %v311
          %316 = vst [vmem:[%s314 + $0x8] sm:$0xff] %v312
          %v317 = vlaneseq
          %v318 = vshrl.u32 %v317, 7
          %v319 = vsub.s32 7, %v318
          %v320 = vrot.slane %v311, %v319
          %v321 = vlaneseq
          %v322 = vshrl.u32 %v321, 7
          %v323 = vsub.s32 7, %v322
          %v324 = vrot.slane %v312, %v323
          %325 = vst [vmem:[#allocation2] sm:$0xff] %v320
          %326 = vst [vmem:[#allocation2 + $0x8] sm:$0xff] %v324
        $region41: #{tpu_custom_call.1} parent=27 // loop_footer
          %s280 = sadd.s32 1, %s276
        $region42: #{tpu_custom_call.1} parent=27 // loop_footer_branch
          %275 = sbr.rel target = $region38
        $region43: #{tpu_custom_call.1} parent=27 // loop_exit
          _
        %s327 = sand.u32 %s106, 1
        %s328 = scalar_lea.sflag [#allocation5], %s327
        %s329 = sand.u32 %s106, 1
        %s330 = smul.addr %s329, 128
        %s331 = scalar_lea.vmem [#allocation6], %s330
        // Predicated region
        $region44: #{tpu_custom_call.1} parent=27 // pred_check
          %p332 = pneg %p116
        $region45: #{tpu_custom_call.1} parent=27 // pred_check_branch
          %334 = sbr.rel (%p332) target = $region47
        $region46: #{tpu_custom_call.1} parent=27 // pred_region
          %s335 = smul.u32 8, %s26
          %s336 = smul.u32 2, %s25
          %s338 = ssub.s32 2048, 2048
          %339 = vsyncadd %s328, %s338
          %s340 = smul.addr %s335, 2
          %s341 = sadd.s32 %s336, %s340
          %s342 = smul.addr %s24, 16
          %s343 = sadd.s32 %s341, %s342
          %s344 = smul.addr %s343, 128
          %s345 = scalar_lea.hbm %s2, %s344
          %s346 = sshll.u32 %s331, 4
          %s347 = int_to_ptr.vmem [resolvable:$true] %s346
          %352 = dma.vmem_to_hbm [thread:$0]  %s347, 2048, %s345, %s328, 256, 256, 16
        $region47: #{tpu_custom_call.1} parent=27 // pred_fallthru
          _
      $region28: #{tpu_custom_call.1} parent=5 // pred_fallthru
        _
      %p353 = scmp.le.s32.totalorder 2, %s14
      // Predicated region
      $region48: #{tpu_custom_call.1} parent=5 // pred_check
        %p354 = pneg %p353
      $region49: #{tpu_custom_call.1} parent=5 // pred_check_branch
        %356 = sbr.rel (%p354) target = $region51
      $region50: #{tpu_custom_call.1} parent=5 // pred_region
        %s357 = ssub.s32 %s14, 2
        // Predicated region
        $region52: #{tpu_custom_call.1} parent=50 // pred_check
          %p358 = pneg %p122
        $region53: #{tpu_custom_call.1} parent=50 // pred_check_branch
          %360 = sbr.rel (%p358) target = $region55
        $region54: #{tpu_custom_call.1} parent=50 // pred_region
          %s361 = sand.u32 %s107, 1
          %s362 = scalar_lea.sflag [#allocation5], %s361
          %s363 = sand.u32 %s107, 1
          %s364 = smul.addr %s363, 128
          %s365 = scalar_lea.vmem [#allocation6], %s364
          %366 = dma.done %s362, 2048
        $region55: #{tpu_custom_call.1} parent=50 // pred_fallthru
          _
      $region51: #{tpu_custom_call.1} parent=5 // pred_fallthru
        _
    $region6: #{tpu_custom_call.1} parent=1 // loop_footer
      %s18 = sadd.s32 1, %s14
    $region7: #{tpu_custom_call.1} parent=1 // loop_footer_branch
      %13 = sbr.rel target = $region3
    $region8: #{tpu_custom_call.1} parent=1 // loop_exit
      _
    %367 = vsyncpa [#allocation4], 1
    %s368 = scalar_lea.sflag [#allocation4], 1
    %369 = vsyncpa %s368, 1
    %370 = vsyncpa [#allocation5], 1
    %s371 = scalar_lea.sflag [#allocation5], 1
    %372 = vsyncpa %s371, 1

</llo_original>
